<compile_context>
chip_gen: v5e
topology: v5e:2x2
jax: 0.10.0
libtpu: 0.0.40
codegen_flags: <defaults>
</compile_context>

<pallas_src>
import functools

import jax
import jax.numpy as jnp
from jax.experimental import pallas as pl
from jax.experimental.pallas import tpu as pltpu

_INV_SQRT2 = 0.7071067811865476


def _mlp_kernel(x_ref, w1_ref, b1_ref, w2_ref, b2_ref, o_ref, acc_ref):
    # x_ref: (tm, C), w1_ref: (C, tk), b1_ref: (1, tk),
    # w2_ref: (tk, C), b2_ref: (1, C), o_ref: (tm, C), acc_ref: (tm, C) f32
    k = pl.program_id(1)

    @pl.when(k == 0)
    def _():
        acc_ref[...] = jnp.zeros_like(acc_ref)

    # c_fc slab: (tm, C) @ (C, tk) -> (tm, tk), f32 accumulation on the MXU.
    h = jnp.dot(x_ref[...], w1_ref[...], preferred_element_type=jnp.float32)
    h = h + b1_ref[...]

    # exact (erf-based) GELU in f32, matching torch.nn.GELU() default.
    h = 0.5 * h * (1.0 + jax.lax.erf(h * jnp.float32(_INV_SQRT2)))

    # c_proj partial: (tm, tk) @ (tk, C) accumulated into the f32 scratch.
    acc_ref[...] += jnp.dot(h.astype(w2_ref.dtype), w2_ref[...],
                            preferred_element_type=jnp.float32)

    @pl.when(k == pl.num_programs(1) - 1)
    def _():
        # c_proj bias added once in the finalize step; dropout(p=0) == identity.
        o_ref[...] = (acc_ref[...] + b2_ref[...]).astype(o_ref.dtype)


def _vmem_capacity_bytes():
    try:
        return int(pltpu.get_tpu_info().vmem_capacity_bytes)
    except Exception:
        return 64 << 20  # conservative (v7x-sized) fallback


def _pick_tk(H, target):
    """Largest multiple-of-128 divisor of H that is <= target, else H."""
    best = None
    d = 128
    while d <= min(H, target):
        if H % d == 0:
            best = d
        d += 128
    return best if best is not None else H


def _vmem_estimate(tm, tk, C, itemsize):
    acc = tm * C * 4                       # f32 accumulator (single buffer)
    x_tile = 2 * tm * C * itemsize         # double-buffered x tile
    w1 = 2 * C * tk * itemsize             # double-buffered w1 slab
    b1 = 2 * tk * itemsize
    w2 = 2 * tk * C * itemsize             # double-buffered w2 slab
    b2 = 2 * C * itemsize
    out = 2 * tm * C * itemsize            # double-buffered output tile
    return acc + x_tile + w1 + b1 + w2 + b2 + out


@functools.partial(jax.jit, static_argnames=("tm", "tk", "vmem_limit"))
def _mlp_forward_impl(x, w1, b1, w2, b2, *, tm, tk, vmem_limit):
    B, T, C = x.shape
    H = w1.shape[1]
    M = B * T

    x2 = x.reshape(M, C)
    b1_2d = b1.reshape(1, H)
    b2_2d = b2.reshape(1, C)

    grid = (pl.cdiv(M, tm), H // tk)
    n_row_blocks = pl.cdiv(M, tm)

    itemsize = jnp.dtype(x.dtype).itemsize
    cost = pl.CostEstimate(
        flops=4 * M * C * H,                    # two matmuls
        transcendentals=M * H,                  # erf over hidden activations
        # x read once, output written once, w1/w2/b1 streamed once per row block.
        bytes_accessed=itemsize * (2 * M * C + C
                                   + n_row_blocks * (2 * C * H + H)),
    )

    out2 = pl.pallas_call(
        _mlp_kernel,
        out_shape=jax.ShapeDtypeStruct((M, C), x.dtype),
        grid_spec=pltpu.PrefetchScalarGridSpec(
            num_scalar_prefetch=0,
            grid=grid,
            in_specs=[
                pl.BlockSpec((tm, C), lambda i, k: (i, 0)),   # x row tile
                pl.BlockSpec((C, tk), lambda i, k: (0, k)),   # w1 H-slab
                pl.BlockSpec((1, tk), lambda i, k: (0, k)),   # b1 H-slab
                pl.BlockSpec((tk, C), lambda i, k: (k, 0)),   # w2 H-slab
                pl.BlockSpec((1, C), lambda i, k: (0, 0)),    # b2 (resident)
            ],
            out_specs=pl.BlockSpec((tm, C), lambda i, k: (i, 0)),
            scratch_shapes=[pltpu.VMEM((tm, C), jnp.float32)],
        ),
        compiler_params=pltpu.CompilerParams(
            dimension_semantics=("parallel", "arbitrary"),
            vmem_limit_bytes=vmem_limit,
        ),
        cost_estimate=cost,
    )(x2, w1, b1_2d, w2, b2_2d)

    return out2.reshape(B, T, C)


def mlp_forward(x, w1, b1, w2, b2, *, compute_dtype=None):
    """x: [B, T, C]; w1: [C, 4C]; b1: [4C]; w2: [4C, C]; b2: [C].

    compute_dtype=jnp.bfloat16 casts x/w1/w2 for bf16-native MXUs (v6e/v7x);
    accumulation stays f32.  Default keeps the input dtype (matches the f32
    PyTorch reference exactly).
    """
    if compute_dtype is not None:
        x = x.astype(compute_dtype)
        w1 = w1.astype(compute_dtype)
        w2 = w2.astype(compute_dtype)

    B, T, C = x.shape
    H = w1.shape[1]
    M = B * T
    itemsize = jnp.dtype(x.dtype).itemsize

    # Generation-aware VMEM budget and tile targets.
    capacity = _vmem_capacity_bytes()
    big_vmem = capacity > (96 << 20)              # v5e/v6e: 128 MiB physical
    vmem_limit = min(capacity - (8 << 20), 100 << 20)
    vmem_limit = max(vmem_limit, 32 << 20)

    tm_target = 512 if big_vmem else 256
    tk_target = 512 if (big_vmem or C <= 1024) else 256

    # Row tile: clamp to M; keep (8,128)-granular (or == full dim).
    tm = min(tm_target, M)
    if tm < M:
        tm = max(8, (tm // 8) * 8)

    # Ensure >= 2 blocks on the parallel row axis when the shape allows it
    # (keeps both v7x TensorCores busy for small-M shapes).
    if M >= 16 and pl.cdiv(M, tm) < 2:
        tm = max(8, ((M // 2) // 8) * 8)

    # Hidden-slab tile: largest multiple-of-128 divisor of H (never a full
    # (C, H) w1 block unless H itself is small / indivisible).
    tk = _pick_tk(H, tk_target)

    # Shrink tiles until the (tm, C) accumulator + double-buffered slabs fit.
    while _vmem_estimate(tm, tk, C, itemsize) > vmem_limit and tm > 8:
        tm = max(8, ((tm // 2) // 8) * 8)
    while _vmem_estimate(tm, tk, C, itemsize) > vmem_limit and tk > 128:
        new_tk = _pick_tk(H, tk // 2)
        if new_tk >= tk:
            break
        tk = new_tk
    # TODO(synk): if C is ever so large that even tm=8, tk=128 exceeds VMEM,
    # reintroduce an output-column (j) grid split.

    return _mlp_forward_impl(x, w1, b1, w2, b2, tm=tm, tk=tk,
                             vmem_limit=int(vmem_limit))


def _reference(x, w1, b1, w2, b2):
    h = jnp.dot(x, w1) + b1
    h = jax.nn.gelu(h, approximate=False)
    return jnp.dot(h, w2) + b2


def _make_inputs(key, B, T, C):
    H = 4 * C
    kx, k1, k2, k3, k4 = jax.random.split(key, 5)
    bound1 = 1.0 / (C ** 0.5)
    bound2 = 1.0 / (H ** 0.5)
    x = jax.random.normal(kx, (B, T, C), dtype=jnp.float32)
    w1 = jax.random.uniform(k1, (C, H), jnp.float32, -bound1, bound1)
    b1 = jax.random.uniform(k2, (H,), jnp.float32, -bound1, bound1)
    w2 = jax.random.uniform(k3, (H, C), jnp.float32, -bound2, bound2)
    b2 = jax.random.uniform(k4, (C,), jnp.float32, -bound2, bound2)
    return x, w1, b1, w2, b2


if __name__ == "__main__":
    key = jax.random.PRNGKey(0)
    k_a, k_b = jax.random.split(key)

    # Config A: small GPT-ish block: n_embd=128, hidden=512 (single k-slab).
    x, w1, b1, w2, b2 = _make_inputs(k_a, B=2, T=8, C=128)
    out = jax.block_until_ready(mlp_forward(x, w1, b1, w2, b2))
    ref = _reference(x, w1, b1, w2, b2)
    assert out.shape == x.shape
    assert jnp.allclose(out, ref, atol=1e-4, rtol=1e-4), "mismatch (config A)"

    # Config B: exercises the multi-step reduction grid (H=1024 -> 2 k-slabs)
    # and the multi-block parallel row axis.
    x, w1, b1, w2, b2 = _make_inputs(k_b, B=2, T=64, C=256)
    out = jax.block_until_ready(mlp_forward(x, w1, b1, w2, b2))
    ref = _reference(x, w1, b1, w2, b2)
    assert out.shape == x.shape
    assert jnp.allclose(out, ref, atol=1e-4, rtol=1e-4), "mismatch (config B)"

    print("KERNEL_OK")
</pallas_src>

<mosaic_0001>
module attributes {stable_mosaic.version = 11 : i64} {
  func.func @_mlp_kernel(%arg0: i32, %arg1: i32, %arg2: memref<8x128xf32, #tpu.memory_space<vmem>>, %arg3: memref<128x512xf32, #tpu.memory_space<vmem>>, %arg4: memref<1x512xf32, #tpu.memory_space<vmem>>, %arg5: memref<512x128xf32, #tpu.memory_space<vmem>>, %arg6: memref<1x128xf32, #tpu.memory_space<vmem>>, %arg7: memref<8x128xf32, #tpu.memory_space<vmem>>, %arg8: memref<8x128xf32, #tpu.memory_space<vmem>>) attributes {dimension_semantics = [#tpu.dimension_semantics<parallel>, #tpu.dimension_semantics<arbitrary>], iteration_bounds = array<i64: 2, 1>, scalar_prefetch = 0 : i64, scratch_operands = 1 : i64, tpu.core_type = #tpu.core_type<tc>, window_params = [{transform_indices = @transform_0, window_bounds = array<i64: 8, 128>}, {transform_indices = @transform_1, window_bounds = array<i64: 128, 512>}, {transform_indices = @transform_2, window_bounds = array<i64: 1, 512>}, {transform_indices = @transform_3, window_bounds = array<i64: 512, 128>}, {pipeline_mode = #tpu.pipeline_mode<synchronous>, transform_indices = @transform_4, window_bounds = array<i64: 1, 128>}, {transform_indices = @transform_5, window_bounds = array<i64: 8, 128>}]} {
    %c0_i32 = arith.constant 0 : i32
    %0 = arith.cmpi eq, %arg1, %c0_i32 : i32
    %1 = arith.extui %0 : i1 to i32
    %c0_i32_0 = arith.constant 0 : i32
    %2 = arith.cmpi ne, %1, %c0_i32_0 : i32
    scf.if %2 {
      %cst_18 = arith.constant 0.000000e+00 : f32
      %25 = vector.broadcast %cst_18 : f32 to vector<8x128xf32>
      %c0_19 = arith.constant 0 : index
      %c0_20 = arith.constant 0 : index
      %26 = vector.load %arg8[%c0_19, %c0_20] : memref<8x128xf32, #tpu.memory_space<vmem>>, vector<8x128xf32>
      tpu.vector_store %arg8[%c0_19, %c0_20], %25 {strides = array<i32>} : memref<8x128xf32, #tpu.memory_space<vmem>>, vector<8x128xf32>,
    } else {
    }
    %c0 = arith.constant 0 : index
    %c0_1 = arith.constant 0 : index
    %3 = vector.load %arg2[%c0, %c0_1] : memref<8x128xf32, #tpu.memory_space<vmem>>, vector<8x128xf32>
    %c0_2 = arith.constant 0 : index
    %c0_3 = arith.constant 0 : index
    %4 = vector.load %arg3[%c0_2, %c0_3] : memref<128x512xf32, #tpu.memory_space<vmem>>, vector<128x512xf32>
    %cst = arith.constant dense<0.000000e+00> : vector<8x512xf32>
    %5 = tpu.matmul %3, %4, %cst {dimension_numbers = #tpu.dot_dimension_numbers<[1], [0], [0], [1], [0, 0, 1, 1], [], []>} : vector<8x128xf32>, vector<128x512xf32>, vector<8x512xf32> -> vector<8x512xf32>
    %c0_4 = arith.constant 0 : index
    %c0_5 = arith.constant 0 : index
    %6 = vector.load %arg4[%c0_4, %c0_5] : memref<1x512xf32, #tpu.memory_space<vmem>>, vector<1x512xf32>
    %7 = vector.broadcast %6 : vector<1x512xf32> to vector<8x512xf32>
    %8 = arith.addf %5, %7 : vector<8x512xf32>
    %cst_6 = arith.constant 5.000000e-01 : f32
    %9 = vector.broadcast %cst_6 : f32 to vector<8x512xf32>
    %10 = arith.mulf %9, %8 : vector<8x512xf32>
    %cst_7 = arith.constant 0.707106769 : f32
    %11 = vector.broadcast %cst_7 : f32 to vector<8x512xf32>
    %12 = arith.mulf %8, %11 : vector<8x512xf32>
    %13 = math.erf %12 : vector<8x512xf32>
    %cst_8 = arith.constant 1.000000e+00 : f32
    %14 = vector.broadcast %cst_8 : f32 to vector<8x512xf32>
    %15 = arith.addf %14, %13 : vector<8x512xf32>
    %16 = arith.mulf %10, %15 : vector<8x512xf32>
    %c0_9 = arith.constant 0 : index
    %c0_10 = arith.constant 0 : index
    %17 = vector.load %arg8[%c0_9, %c0_10] : memref<8x128xf32, #tpu.memory_space<vmem>>, vector<8x128xf32>
    %c0_11 = arith.constant 0 : index
    %c0_12 = arith.constant 0 : index
    %18 = vector.load %arg5[%c0_11, %c0_12] : memref<512x128xf32, #tpu.memory_space<vmem>>, vector<512x128xf32>
    %cst_13 = arith.constant dense<0.000000e+00> : vector<8x128xf32>
    %19 = tpu.matmul %16, %18, %cst_13 {dimension_numbers = #tpu.dot_dimension_numbers<[1], [0], [0], [1], [0, 0, 1, 1], [], []>} : vector<8x512xf32>, vector<512x128xf32>, vector<8x128xf32> -> vector<8x128xf32>
    %20 = arith.addf %17, %19 : vector<8x128xf32>
    %c0_14 = arith.constant 0 : index
    %c0_15 = arith.constant 0 : index
    %21 = vector.load %arg8[%c0_14, %c0_15] : memref<8x128xf32, #tpu.memory_space<vmem>>, vector<8x128xf32>
    tpu.vector_store %arg8[%c0_14, %c0_15], %20 {strides = array<i32>} : memref<8x128xf32, #tpu.memory_space<vmem>>, vector<8x128xf32>,
    %c0_i32_16 = arith.constant 0 : i32
    %22 = arith.cmpi eq, %arg1, %c0_i32_16 : i32
    %23 = arith.extui %22 : i1 to i32
    %c0_i32_17 = arith.constant 0 : i32
    %24 = arith.cmpi ne, %23, %c0_i32_17 : i32
    scf.if %24 {
      %c0_18 = arith.constant 0 : index
      %c0_19 = arith.constant 0 : index
      %25 = vector.load %arg8[%c0_18, %c0_19] : memref<8x128xf32, #tpu.memory_space<vmem>>, vector<8x128xf32>
      %c0_20 = arith.constant 0 : index
      %c0_21 = arith.constant 0 : index
      %26 = vector.load %arg6[%c0_20, %c0_21] : memref<1x128xf32, #tpu.memory_space<vmem>>, vector<1x128xf32>
      %27 = vector.broadcast %26 : vector<1x128xf32> to vector<8x128xf32>
      %28 = arith.addf %25, %27 : vector<8x128xf32>
      %c0_22 = arith.constant 0 : index
      %c0_23 = arith.constant 0 : index
      %29 = vector.load %arg7[%c0_22, %c0_23] : memref<8x128xf32, #tpu.memory_space<vmem>>, vector<8x128xf32>
      tpu.vector_store %arg7[%c0_22, %c0_23], %28 {strides = array<i32>} : memref<8x128xf32, #tpu.memory_space<vmem>>, vector<8x128xf32>,
    } else {
    }
    return
  }
  func.func @transform_0(%arg0: i32, %arg1: i32) -> (i32, i32) {
    %c0_i32 = arith.constant 0 : i32
    %c0_i32_0 = arith.constant 0 : i32
    return %arg0, %c0_i32 : i32, i32
  }
  func.func @transform_1(%arg0: i32, %arg1: i32) -> (i32, i32) {
    %c0_i32 = arith.constant 0 : i32
    %c0_i32_0 = arith.constant 0 : i32
    return %c0_i32, %arg1 : i32, i32
  }
  func.func @transform_2(%arg0: i32, %arg1: i32) -> (i32, i32) {
    %c0_i32 = arith.constant 0 : i32
    %c0_i32_0 = arith.constant 0 : i32
    return %c0_i32, %arg1 : i32, i32
  }
  func.func @transform_3(%arg0: i32, %arg1: i32) -> (i32, i32) {
    %c0_i32 = arith.constant 0 : i32
    %c0_i32_0 = arith.constant 0 : i32
    return %arg1, %c0_i32 : i32, i32
  }
  func.func @transform_4(%arg0: i32, %arg1: i32) -> (i32, i32) {
    %c0_i32 = arith.constant 0 : i32
    %c0_i32_0 = arith.constant 0 : i32
    %c0_i32_1 = arith.constant 0 : i32
    return %c0_i32, %c0_i32_0 : i32, i32
  }
  func.func @transform_5(%arg0: i32, %arg1: i32) -> (i32, i32) {
    %c0_i32 = arith.constant 0 : i32
    %c0_i32_0 = arith.constant 0 : i32
    return %arg0, %c0_i32 : i32, i32
  }
}

</mosaic_0001>

<llo_original>
// kernel: _mlp_forward_impl.1
$region0: #{_mlp_forward_impl.1}
  #allocation0 [shape = 'u32[]', space=smem, size = 0x4, offset = 0x4, fixed_abs, tag = 'smem constant byte address 0x4 - core index']
  #allocation1 [shape = 'u32[72,128]{1,0:T(1,128)}', space=vmem, size = 0x9000, scoped, tag = 'internal scratch']
  #allocation2 [shape = 'f32[8,128]{1,0:T(8,128)}', space=vmem, size = 0x1000, scoped, tag = 'scratch operand']
  %s0 = inlined_call_operand.hbm [shape: f32[16,128], index: 0, kind: input, shape index: {}]
  %s1 = inlined_call_operand.hbm [shape: f32[128,512], index: 1, kind: input, shape index: {}]
  %s2 = inlined_call_operand.vmem [shape: f32[1,512], index: 2, kind: input, shape index: {}]
  %s3 = inlined_call_operand.hbm [shape: f32[512,128], index: 3, kind: input, shape index: {}]
  %s4 = inlined_call_operand.vmem [shape: f32[1,128], index: 4, kind: input, shape index: {}]
  %s5 = inlined_call_operand.hbm [shape: f32[16,128], index: 5, kind: output, shape index: {}]
  %s6 = sld [smem:[#allocation0]]
  $region73: #{_mlp_forward_impl.1} parent=0
    _
  %s8 = ssub.s32 1, %s6
  %s9 = scalar_select 0, %s8, %s6
  $region1: #{_mlp_forward_impl.1} parent=0
    #allocation3 [shape = 'u8[8192]{0}', space=vmem, size = 0x2000, scoped, tag = 'input window, operand 0']
    #allocation4 [shape = 's32[2]{0}', space=sflag, size = 0x8, scoped, tag = 'scoped memory for _mlp_forward_impl.1']
    #allocation5 [shape = 's32[2]{0}', space=sflag, size = 0x8, scoped, tag = 'scoped memory for _mlp_forward_impl.1']
    #allocation6 [shape = 'u8[262144]{0}', space=vmem, size = 0x40000, scoped, tag = 'input window, operand 1, single buffered']
    #allocation7 [shape = 's32[1]{0}', space=sflag, size = 0x4, scoped, tag = 'scoped memory for _mlp_forward_impl.1']
    #allocation8 [shape = 'u8[262144]{0}', space=vmem, size = 0x40000, scoped, tag = 'input window, operand 3, single buffered']
    #allocation9 [shape = 'u8[8192]{0}', space=vmem, size = 0x2000, scoped, tag = 'output window, operand 0']
    %10 = vsyncpa [#allocation4], 0
    %s11 = scalar_lea.sflag [#allocation4], 1
    %12 = vsyncpa %s11, 0
    %13 = vsyncpa [#allocation7], 0
    %14 = vsyncpa [#allocation5], 0
    %s15 = scalar_lea.sflag [#allocation5], 1
    %16 = vsyncpa %s15, 0
    loop: start=0, step=1, limit=4
    $region2: #{_mlp_forward_impl.1} parent=1 // loop_pre_header
      _
    $region3: #{_mlp_forward_impl.1} parent=1 // loop_header
      %s18 = sphi 0, %s22
      %p19 = scmp.ge.s32.totalorder %s18, 4
      %s25 = sphi 0, %s37
      %s26 = sphi 0, %s33
      %s27 = sphi 0, %s25
      %s28 = sphi 0, %s26
      %s29 = sphi 0, %s27
      %s30 = sphi 0, %s28
      %s40 = sphi 0, %s42
      %s43 = sphi 0, %s40
      %s44 = sphi 0, %s43
      %s60 = sphi 0, %s44
      %s66 = sphi 0, %s68
      %s69 = sphi 0, %s66
      %s70 = sphi 0, %s69
      %s86 = sphi 0, %s70
      %s92 = sphi 0, %s94
      %s95 = sphi 0, %s92
      %s96 = sphi 0, %s95
      %s112 = sphi 0, %s96
      %s118 = sphi 0, %s120
      %s121 = sphi 0, %s118
      %s122 = sphi 0, %s121
      %s138 = sphi 0, %s122
      %s142 = sphi 0, %s142
      %s144 = sphi 0, %s142
      %s145 = sphi 0, %s144
      %s159 = sphi 0, %s145
      %s165 = sphi 0, %s167
      %s168 = sphi 0, %s165
      %s169 = sphi 0, %s168
      %s185 = sphi 0, %s169
    $region4: #{_mlp_forward_impl.1} parent=1 // loop_header_branch
      %21 = sbr.rel (%p19) target = $region8
    $region5: #{_mlp_forward_impl.1} parent=1 // loop_body
      %s23 = ssub.s32 %s18, 1
      %s24 = ssub.s32 %s18, 2
      %s31 = sadd.s32 1, %s26
      %p32 = scmp.ge.s32.totalorder %s31, 1
      %s33 = scalar_select %p32, 0, %s31
      %s34 = sadd.s32 1, %s25
      %s35 = scalar_select %p32, %s34, %s25
      %p36 = scmp.ge.s32.totalorder %s35, 2
      %s37 = scalar_select %p36, 0, %s35
      %s38 = ssub.s32 %s25, %s37
      %p39 = scmp.eq.s32.totalorder %s38, 0
      %s41 = sadd.s32 %s40, 1
      %s42 = scalar_select %p39, %s40, %s41
      %p45 = pneg %p39
      %p46 = scmp.eq.s32.totalorder %s18, 1
      %p47 = por %p45, %p46
      %p48 = scmp.ne.s32.totalorder %s40, %s43
      %p49 = scmp.eq.s32.totalorder %s18, 0
      %p50 = por %p48, %p49
      %p51 = scmp.ne.s32.totalorder %s40, %s43
      %p52 = scmp.eq.s32.totalorder %s23, 1
      %p53 = por %p51, %p52
      %p54 = scmp.ne.s32.totalorder %s43, %s44
      %p55 = scmp.eq.s32.totalorder %s23, 0
      %p56 = por %p54, %p55
      %p57 = scmp.ne.s32.totalorder %s43, %s44
      %p58 = scmp.eq.s32.totalorder %s24, 1
      %p59 = por %p57, %p58
      %p61 = scmp.ne.s32.totalorder %s44, %s60
      %p62 = scmp.eq.s32.totalorder %s24, 0
      %p63 = por %p61, %p62
      %s64 = ssub.s32 %s26, %s33
      %p65 = scmp.eq.s32.totalorder %s64, 0
      %s67 = sadd.s32 %s66, 1
      %s68 = scalar_select %p65, %s66, %s67
      %p71 = pneg %p65
      %p72 = scmp.eq.s32.totalorder %s18, 1
      %p73 = por %p71, %p72
      %p74 = scmp.ne.s32.totalorder %s66, %s69
      %p75 = scmp.eq.s32.totalorder %s18, 0
      %p76 = por %p74, %p75
      %p77 = scmp.ne.s32.totalorder %s66, %s69
      %p78 = scmp.eq.s32.totalorder %s23, 1
      %p79 = por %p77, %p78
      %p80 = scmp.ne.s32.totalorder %s69, %s70
      %p81 = scmp.eq.s32.totalorder %s23, 0
      %p82 = por %p80, %p81
      %p83 = scmp.ne.s32.totalorder %s69, %s70
      %p84 = scmp.eq.s32.totalorder %s24, 1
      %p85 = por %p83, %p84
      %p87 = scmp.ne.s32.totalorder %s70, %s86
      %p88 = scmp.eq.s32.totalorder %s24, 0
      %p89 = por %p87, %p88
      %s90 = ssub.s32 %s26, %s33
      %p91 = scmp.eq.s32.totalorder %s90, 0
      %s93 = sadd.s32 %s92, 1
      %s94 = scalar_select %p91, %s92, %s93
      %p97 = pneg %p91
      %p98 = scmp.eq.s32.totalorder %s18, 1
      %p99 = por %p97, %p98
      %p100 = scmp.ne.s32.totalorder %s92, %s95
      %p101 = scmp.eq.s32.totalorder %s18, 0
      %p102 = por %p100, %p101
      %p103 = scmp.ne.s32.totalorder %s92, %s95
      %p104 = scmp.eq.s32.totalorder %s23, 1
      %p105 = por %p103, %p104
      %p106 = scmp.ne.s32.totalorder %s95, %s96
      %p107 = scmp.eq.s32.totalorder %s23, 0
      %p108 = por %p106, %p107
      %p109 = scmp.ne.s32.totalorder %s95, %s96
      %p110 = scmp.eq.s32.totalorder %s24, 1
      %p111 = por %p109, %p110
      %p113 = scmp.ne.s32.totalorder %s96, %s112
      %p114 = scmp.eq.s32.totalorder %s24, 0
      %p115 = por %p113, %p114
      %s116 = ssub.s32 %s26, %s33
      %p117 = scmp.eq.s32.totalorder %s116, 0
      %s119 = sadd.s32 %s118, 1
      %s120 = scalar_select %p117, %s118, %s119
      %p123 = pneg %p117
      %p124 = scmp.eq.s32.totalorder %s18, 1
      %p125 = por %p123, %p124
      %p126 = scmp.ne.s32.totalorder %s118, %s121
      %p127 = scmp.eq.s32.totalorder %s18, 0
      %p128 = por %p126, %p127
      %p129 = scmp.ne.s32.totalorder %s118, %s121
      %p130 = scmp.eq.s32.totalorder %s23, 1
      %p131 = por %p129, %p130
      %p132 = scmp.ne.s32.totalorder %s121, %s122
      %p133 = scmp.eq.s32.totalorder %s23, 0
      %p134 = por %p132, %p133
      %p135 = scmp.ne.s32.totalorder %s121, %s122
      %p136 = scmp.eq.s32.totalorder %s24, 1
      %p137 = por %p135, %p136
      %p139 = scmp.ne.s32.totalorder %s122, %s138
      %p140 = scmp.eq.s32.totalorder %s24, 0
      %p141 = por %p139, %p140
      %s143 = sadd.s32 %s142, 1
      %p146 = scmp.eq.s32.totalorder %s18, 1
      %p147 = scmp.ne.s32.totalorder %s142, %s144
      %p148 = scmp.eq.s32.totalorder %s18, 0
      %p149 = por %p147, %p148
      %p150 = scmp.ne.s32.totalorder %s142, %s144
      %p151 = scmp.eq.s32.totalorder %s23, 1
      %p152 = por %p150, %p151
      %p153 = scmp.ne.s32.totalorder %s144, %s145
      %p154 = scmp.eq.s32.totalorder %s23, 0
      %p155 = por %p153, %p154
      %p156 = scmp.ne.s32.totalorder %s144, %s145
      %p157 = scmp.eq.s32.totalorder %s24, 1
      %p158 = por %p156, %p157
      %p160 = scmp.ne.s32.totalorder %s145, %s159
      %p161 = scmp.eq.s32.totalorder %s24, 0
      %p162 = por %p160, %p161
      %s163 = ssub.s32 %s25, %s37
      %p164 = scmp.eq.s32.totalorder %s163, 0
      %s166 = sadd.s32 %s165, 1
      %s167 = scalar_select %p164, %s165, %s166
      %p170 = pneg %p164
      %p171 = scmp.eq.s32.totalorder %s18, 1
      %p172 = por %p170, %p171
      %p173 = scmp.ne.s32.totalorder %s165, %s168
      %p174 = scmp.eq.s32.totalorder %s18, 0
      %p175 = por %p173, %p174
      %p176 = scmp.ne.s32.totalorder %s165, %s168
      %p177 = scmp.eq.s32.totalorder %s23, 1
      %p178 = por %p176, %p177
      %p179 = scmp.ne.s32.totalorder %s168, %s169
      %p180 = scmp.eq.s32.totalorder %s23, 0
      %p181 = por %p179, %p180
      %p182 = scmp.ne.s32.totalorder %s168, %s169
      %p183 = scmp.eq.s32.totalorder %s24, 1
      %p184 = por %p182, %p183
      %p186 = scmp.ne.s32.totalorder %s169, %s185
      %p187 = scmp.eq.s32.totalorder %s24, 0
      %p188 = por %p186, %p187
      %p189 = scmp.le.s32.totalorder 1, %s18
      %p190 = scmp.lt.s32.totalorder %s18, 3
      %p191 = pnand %p189, %p190
      %p192 = pneg %p191
      // Predicated region
      $region9: #{_mlp_forward_impl.1} parent=5 // pred_check
        _
      $region10: #{_mlp_forward_impl.1} parent=5 // pred_check_branch
        %194 = sbr.rel (%p191) target = $region12
      $region11: #{_mlp_forward_impl.1} parent=5 // pred_region
        %s195 = ssub.s32 %s18, 1
        // Predicated region
        $region13: #{_mlp_forward_impl.1} parent=11 // pred_check
          %p196 = pneg %p82
        $region14: #{_mlp_forward_impl.1} parent=11 // pred_check_branch
          %198 = sbr.rel (%p196) target = $region16
        $region15: #{_mlp_forward_impl.1} parent=11 // pred_region
          %s199 = smul.u32 4, %s28
          %201 = vsyncadd [#allocation7], 0
          %s202 = smul.addr %s199, 8
          %s203 = scalar_lea.hbm %s1, %s202
          %s204 = sshll.u32 %s203, 4
          %s205 = int_to_ptr.hbm [resolvable:$true] %s204
          %s206 = sshll.u32 [#allocation6], 4
          %s207 = int_to_ptr.vmem [resolvable:$true] %s206
          %212 = dma.hbm_to_vmem [thread:$0]  %s205, 8192, %s207, [#allocation7], 512, 512, 32
        $region16: #{_mlp_forward_impl.1} parent=11 // pred_fallthru
          _
        // Predicated region
        $region17: #{_mlp_forward_impl.1} parent=11 // pred_check
          %p213 = pneg %p108
        $region18: #{_mlp_forward_impl.1} parent=11 // pred_check_branch
          %215 = sbr.rel (%p213) target = $region20
        $region19: #{_mlp_forward_impl.1} parent=11 // pred_region
          %s216 = smul.u32 4, %s28
          %p217 = scmp.lt.s32.totalorder %s216, 3
          %s218 = scalar_select %p217, %s216, 3
          %s219 = scalar_lea.vmem %s2, %s218
          %s220 = smul.u32 4, %s28
        $region20: #{_mlp_forward_impl.1} parent=11 // pred_fallthru
          _
        // Predicated region
        $region21: #{_mlp_forward_impl.1} parent=11 // pred_check
          %p221 = pneg %p134
        $region22: #{_mlp_forward_impl.1} parent=11 // pred_check_branch
          %223 = sbr.rel (%p221) target = $region24
        $region23: #{_mlp_forward_impl.1} parent=11 // pred_region
          %s224 = smul.u32 64, %s28
          %226 = vsyncadd [#allocation7], 0
          %s227 = smul.addr %s224, 8
          %s228 = scalar_lea.hbm %s3, %s227
          %s229 = sshll.u32 %s228, 4
          %s230 = int_to_ptr.hbm [resolvable:$true] %s229
          %s231 = sshll.u32 [#allocation8], 4
          %s232 = int_to_ptr.vmem [resolvable:$true] %s231
          %237 = dma.hbm_to_vmem [thread:$0]  %s230, 8192, %s232, [#allocation7], 128, 128, 8
        $region24: #{_mlp_forward_impl.1} parent=11 // pred_fallthru
          _
        // Predicated region
        $region25: #{_mlp_forward_impl.1} parent=11 // pred_check
          %p238 = pneg %p155
        $region26: #{_mlp_forward_impl.1} parent=11 // pred_check_branch
          %240 = sbr.rel (%p238) target = $region28
        $region27: #{_mlp_forward_impl.1} parent=11 // pred_region
          _
        $region28: #{_mlp_forward_impl.1} parent=11 // pred_fallthru
          _
      $region12: #{_mlp_forward_impl.1} parent=5 // pred_fallthru
        _
      %p241 = scmp.lt.s32.totalorder %s18, 2
      // Predicated region
      $region29: #{_mlp_forward_impl.1} parent=5 // pred_check
        %p242 = pneg %p241
      $region30: #{_mlp_forward_impl.1} parent=5 // pred_check_branch
        %244 = sbr.rel (%p242) target = $region32
      $region31: #{_mlp_forward_impl.1} parent=5 // pred_region
        // Predicated region
        $region33: #{_mlp_forward_impl.1} parent=31 // pred_check
          %p245 = pneg %p50
        $region34: #{_mlp_forward_impl.1} parent=31 // pred_check_branch
          %247 = sbr.rel (%p245) target = $region36
        $region35: #{_mlp_forward_impl.1} parent=31 // pred_region
          %s248 = sand.u32 %s40, 1
          %s249 = scalar_lea.sflag [#allocation4], %s248
          %s250 = sand.u32 %s40, 1
          %s251 = smul.addr %s250, 8
          %s252 = scalar_lea.vmem [#allocation3], %s251
          %254 = vsyncadd %s249, 0
          %s255 = smul.addr %s25, 8
          %s256 = scalar_lea.hbm %s0, %s255
          %s258 = sshll.u32 %s256, 4
          %s259 = int_to_ptr.hbm [resolvable:$true] %s258
          %s260 = sshll.u32 %s252, 4
          %s261 = int_to_ptr.vmem [resolvable:$true] %s260
          %263 = dma.hbm_to_vmem [thread:$0]  %s259, 128, %s261, %s249
        $region36: #{_mlp_forward_impl.1} parent=31 // pred_fallthru
          _
      $region32: #{_mlp_forward_impl.1} parent=5 // pred_fallthru
        _
      %p264 = scmp.le.s32.totalorder 1, %s18
      %p265 = scmp.lt.s32.totalorder %s18, 3
      %p266 = pnand %p264, %p265
      %p267 = pneg %p266
      // Predicated region
      $region37: #{_mlp_forward_impl.1} parent=5 // pred_check
        _
      $region38: #{_mlp_forward_impl.1} parent=5 // pred_check_branch
        %269 = sbr.rel (%p266) target = $region40
      $region39: #{_mlp_forward_impl.1} parent=5 // pred_region
        %s270 = ssub.s32 %s18, 1
        %s271 = sand.u32 %s43, 1
        %s272 = scalar_lea.sflag [#allocation4], %s271
        %s273 = sand.u32 %s43, 1
        %s274 = smul.addr %s273, 8
        %s275 = scalar_lea.vmem [#allocation3], %s274
        // Predicated region
        $region41: #{_mlp_forward_impl.1} parent=39 // pred_check
          %p276 = pneg %p56
        $region42: #{_mlp_forward_impl.1} parent=39 // pred_check_branch
          %278 = sbr.rel (%p276) target = $region44
        $region43: #{_mlp_forward_impl.1} parent=39 // pred_region
          %280 = dma.done %s272, 128
        $region44: #{_mlp_forward_impl.1} parent=39 // pred_fallthru
          _
        // Predicated region
        $region45: #{_mlp_forward_impl.1} parent=39 // pred_check
          %p281 = pneg %p82
        $region46: #{_mlp_forward_impl.1} parent=39 // pred_check_branch
          %283 = sbr.rel (%p281) target = $region48
        $region47: #{_mlp_forward_impl.1} parent=39 // pred_region
          %285 = dma.done [#allocation7], 8192
        $region48: #{_mlp_forward_impl.1} parent=39 // pred_fallthru
          _
        // Predicated region
        $region49: #{_mlp_forward_impl.1} parent=39 // pred_check
          %p286 = pneg %p134
        $region50: #{_mlp_forward_impl.1} parent=39 // pred_check_branch
          %288 = sbr.rel (%p286) target = $region52
        $region51: #{_mlp_forward_impl.1} parent=39 // pred_region
          %290 = dma.done [#allocation7], 8192
        $region52: #{_mlp_forward_impl.1} parent=39 // pred_fallthru
          _
        %s291 = sand.u32 %s43, 1
        %s292 = scalar_lea.sflag [#allocation4], %s291
        %s293 = sand.u32 %s43, 1
        %s294 = smul.addr %s293, 8
        %s295 = scalar_lea.vmem [#allocation3], %s294
        %p296 = pneg %p56
        %p297 = pneg %p53
        %p298 = pneg %p82
        %p299 = pneg %p79
        %s300 = smul.u32 4, %s28
        %p301 = scmp.lt.s32.totalorder %s300, 3
        %s302 = scalar_select %p301, %s300, 3
        %s303 = scalar_lea.vmem %s2, %s302
        %p304 = pneg %p108
        %p305 = pneg %p105
        %p306 = pneg %p134
        %p307 = pneg %p131
        %p308 = pneg %p155
        %p309 = pneg %p152
        %p310 = pneg %p181
        %p311 = pneg %p178
        %s312 = sand.u32 %s168, 1
        %s313 = scalar_lea.sflag [#allocation5], %s312
        %s314 = sand.u32 %s168, 1
        %s315 = smul.addr %s314, 8
        %s316 = scalar_lea.vmem [#allocation9], %s315
        %s317 = smul.u32 4, %s28
        %s318 = smul.u32 4, %s28
        %p319 = scmp.lt.s32.totalorder %s318, 3
        %s320 = scalar_select %p319, %s318, 3
        %s321 = scalar_lea.vmem %s2, %s320
        %s322 = smul.u32 4, %s28
        %s323 = smul.u32 64, %s28
        %p324 = scmp.eq.s32.totalorder %s28, 0
        // Predicated region
        $region53: #{_mlp_forward_impl.1} parent=39 // pred_check
          %p325 = pneg %p324
        $region54: #{_mlp_forward_impl.1} parent=39 // pred_check_branch
          %327 = sbr.rel (%p325) target = $region56
        $region55: #{_mlp_forward_impl.1} parent=39 // pred_region
          %328 = vst [vmem:[#allocation2] sm:$0xff] 0.0
        $region56: #{_mlp_forward_impl.1} parent=39 // pred_fallthru
          _
        %v329 = vld [vmem:[%s275] sm:$0xff]
        %v330 = vld [vmem:[#allocation6] sm:$0xff]
        %v331 = vld [vmem:[#allocation6 + $0x8] sm:$0xff]
        %v332 = vld [vmem:[#allocation6 + $0x10] sm:$0xff]
        %v333 = vld [vmem:[#allocation6 + $0x18] sm:$0xff]
        %v334 = vld [vmem:[#allocation6 + $0x20] sm:$0xff]
        %v335 = vld [vmem:[#allocation6 + $0x28] sm:$0xff]
        %v336 = vld [vmem:[#allocation6 + $0x30] sm:$0xff]
        %v337 = vld [vmem:[#allocation6 + $0x38] sm:$0xff]
        %v338 = vld [vmem:[#allocation6 + $0x40] sm:$0xff]
        %v339 = vld [vmem:[#allocation6 + $0x48] sm:$0xff]
        %v340 = vld [vmem:[#allocation6 + $0x50] sm:$0xff]
        %v341 = vld [vmem:[#allocation6 + $0x58] sm:$0xff]
        %v342 = vld [vmem:[#allocation6 + $0x60] sm:$0xff]
        %v343 = vld [vmem:[#allocation6 + $0x68] sm:$0xff]
        %v344 = vld [vmem:[#allocation6 + $0x70] sm:$0xff]
        %v345 = vld [vmem:[#allocation6 + $0x78] sm:$0xff]
        %v346 = vld [vmem:[#allocation6 + $0x80] sm:$0xff]
        %v347 = vld [vmem:[#allocation6 + $0x88] sm:$0xff]
        %v348 = vld [vmem:[#allocation6 + $0x90] sm:$0xff]
        %v349 = vld [vmem:[#allocation6 + $0x98] sm:$0xff]
        %v350 = vld [vmem:[#allocation6 + $0xa0] sm:$0xff]
        %v351 = vld [vmem:[#allocation6 + $0xa8] sm:$0xff]
        %v352 = vld [vmem:[#allocation6 + $0xb0] sm:$0xff]
        %v353 = vld [vmem:[#allocation6 + $0xb8] sm:$0xff]
        %v354 = vld [vmem:[#allocation6 + $0xc0] sm:$0xff]
        %v355 = vld [vmem:[#allocation6 + $0xc8] sm:$0xff]
        %v356 = vld [vmem:[#allocation6 + $0xd0] sm:$0xff]
        %v357 = vld [vmem:[#allocation6 + $0xd8] sm:$0xff]
        %v358 = vld [vmem:[#allocation6 + $0xe0] sm:$0xff]
        %v359 = vld [vmem:[#allocation6 + $0xe8] sm:$0xff]
        %v360 = vld [vmem:[#allocation6 + $0xf0] sm:$0xff]
        %v361 = vld [vmem:[#allocation6 + $0xf8] sm:$0xff]
        %v362 = vld [vmem:[#allocation6 + $0x100] sm:$0xff]
        %v363 = vld [vmem:[#allocation6 + $0x108] sm:$0xff]
        %v364 = vld [vmem:[#allocation6 + $0x110] sm:$0xff]
        %v365 = vld [vmem:[#allocation6 + $0x118] sm:$0xff]
        %v366 = vld [vmem:[#allocation6 + $0x120] sm:$0xff]
        %v367 = vld [vmem:[#allocation6 + $0x128] sm:$0xff]
        %v368 = vld [vmem:[#allocation6 + $0x130] sm:$0xff]
        %v369 = vld [vmem:[#allocation6 + $0x138] sm:$0xff]
        %v370 = vld [vmem:[#allocation6 + $0x140] sm:$0xff]
        %v371 = vld [vmem:[#allocation6 + $0x148] sm:$0xff]
        %v372 = vld [vmem:[#allocation6 + $0x150] sm:$0xff]
        %v373 = vld [vmem:[#allocation6 + $0x158] sm:$0xff]
        %v374 = vld [vmem:[#allocation6 + $0x160] sm:$0xff]
        %v375 = vld [vmem:[#allocation6 + $0x168] sm:$0xff]
        %v376 = vld [vmem:[#allocation6 + $0x170] sm:$0xff]
        %v377 = vld [vmem:[#allocation6 + $0x178] sm:$0xff]
        %v378 = vld [vmem:[#allocation6 + $0x180] sm:$0xff]
        %v379 = vld [vmem:[#allocation6 + $0x188] sm:$0xff]
        %v380 = vld [vmem:[#allocation6 + $0x190] sm:$0xff]
        %v381 = vld [vmem:[#allocation6 + $0x198] sm:$0xff]
        %v382 = vld [vmem:[#allocation6 + $0x1a0] sm:$0xff]
        %v383 = vld [vmem:[#allocation6 + $0x1a8] sm:$0xff]
        %v384 = vld [vmem:[#allocation6 + $0x1b0] sm:$0xff]
        %v385 = vld [vmem:[#allocation6 + $0x1b8] sm:$0xff]
        %v386 = vld [vmem:[#allocation6 + $0x1c0] sm:$0xff]
        %v387 = vld [vmem:[#allocation6 + $0x1c8] sm:$0xff]
        %v388 = vld [vmem:[#allocation6 + $0x1d0] sm:$0xff]
        %v389 = vld [vmem:[#allocation6 + $0x1d8] sm:$0xff]
        %v390 = vld [vmem:[#allocation6 + $0x1e0] sm:$0xff]
        %v391 = vld [vmem:[#allocation6 + $0x1e8] sm:$0xff]
        %v392 = vld [vmem:[#allocation6 + $0x1f0] sm:$0xff]
        %v393 = vld [vmem:[#allocation6 + $0x1f8] sm:$0xff]
        %v394 = vld [vmem:[%s321] sm:$0xf]
        %v396 = vperm.slane %v394, 0
        %v397 = vperm.slane %v394, 1
        %v398 = vperm.slane %v394, 2
        %v399 = vperm.slane %v394, 3
        %404 = vmatpush.msra.mxu0 %v390
        %405 = vmatpush.msra.mxu0 %v386
        %406 = vmatpush.msra.mxu0 %v382
        %407 = vmatpush.msra.mxu0 %v378
        %408 = vmatpush.msra.mxu0 %v374
        %409 = vmatpush.msra.mxu0 %v370
        %410 = vmatpush.msra.mxu0 %v366
        %411 = vmatpush.msra.mxu0 %v362
        %412 = vmatpush.msra.mxu0 %v358
        %413 = vmatpush.msra.mxu0 %v354
        %414 = vmatpush.msra.mxu0 %v350
        %415 = vmatpush.msra.mxu0 %v346
        %416 = vmatpush.msra.mxu0 %v342
        %417 = vmatpush.msra.mxu0 %v338
        %418 = vmatpush.msra.mxu0 %v334
        %419 = vmatpush.msra.mxu0 %v330
        %420 = vmatmul.f32.gmra.mxu0 %v329
        %v421 = vpop.f32.mrf.mxu0
        %v422 = vadd.f32 %v396, %v421
        %423 = vdwg.mxu0
        %424 = vmatpush.msra.mxu0 %v391
        %425 = vmatpush.msra.mxu0 %v387
        %426 = vmatpush.msra.mxu0 %v383
        %427 = vmatpush.msra.mxu0 %v379
        %428 = vmatpush.msra.mxu0 %v375
        %429 = vmatpush.msra.mxu0 %v371
        %430 = vmatpush.msra.mxu0 %v367
        %431 = vmatpush.msra.mxu0 %v363
        %432 = vmatpush.msra.mxu0 %v359
        %433 = vmatpush.msra.mxu0 %v355
        %434 = vmatpush.msra.mxu0 %v351
        %435 = vmatpush.msra.mxu0 %v347
        %436 = vmatpush.msra.mxu0 %v343
        %437 = vmatpush.msra.mxu0 %v339
        %438 = vmatpush.msra.mxu0 %v335
        %439 = vmatpush.msra.mxu0 %v331
        %440 = vmatmul.f32.gmra.mxu0 %v329
        %v441 = vpop.f32.mrf.mxu0
        %v442 = vadd.f32 %v397, %v441
        %443 = vdwg.mxu0
        %444 = vmatpush.msra.mxu0 %v392
        %445 = vmatpush.msra.mxu0 %v388
        %446 = vmatpush.msra.mxu0 %v384
        %447 = vmatpush.msra.mxu0 %v380
        %448 = vmatpush.msra.mxu0 %v376
        %449 = vmatpush.msra.mxu0 %v372
        %450 = vmatpush.msra.mxu0 %v368
        %451 = vmatpush.msra.mxu0 %v364
        %452 = vmatpush.msra.mxu0 %v360
        %453 = vmatpush.msra.mxu0 %v356
        %454 = vmatpush.msra.mxu0 %v352
        %455 = vmatpush.msra.mxu0 %v348
        %456 = vmatpush.msra.mxu0 %v344
        %457 = vmatpush.msra.mxu0 %v340
        %458 = vmatpush.msra.mxu0 %v336
        %459 = vmatpush.msra.mxu0 %v332
        %460 = vmatmul.f32.gmra.mxu0 %v329
        %v461 = vpop.f32.mrf.mxu0
        %v462 = vadd.f32 %v398, %v461
        %463 = vdwg.mxu0
        %464 = vmatpush.msra.mxu0 %v393
        %465 = vmatpush.msra.mxu0 %v389
        %466 = vmatpush.msra.mxu0 %v385
        %467 = vmatpush.msra.mxu0 %v381
        %468 = vmatpush.msra.mxu0 %v377
        %469 = vmatpush.msra.mxu0 %v373
        %470 = vmatpush.msra.mxu0 %v369
        %471 = vmatpush.msra.mxu0 %v365
        %472 = vmatpush.msra.mxu0 %v361
        %473 = vmatpush.msra.mxu0 %v357
        %474 = vmatpush.msra.mxu0 %v353
        %475 = vmatpush.msra.mxu0 %v349
        %476 = vmatpush.msra.mxu0 %v345
        %477 = vmatpush.msra.mxu0 %v341
        %478 = vmatpush.msra.mxu0 %v337
        %479 = vmatpush.msra.mxu0 %v333
        %480 = vmatmul.f32.gmra.mxu0 %v329
        %v481 = vpop.f32.mrf.mxu0
        %v482 = vadd.f32 %v399, %v481
        %483 = vdwg.mxu0
        %v484 = vmul.f32 %v422, 0.5
        %v485 = vmul.f32 %v442, 0.5
        %v486 = vmul.f32 %v462, 0.5
        %v487 = vmul.f32 %v482, 0.5
        %v488 = vmul.f32 %v422, 0.70710677
        %v489 = vmul.f32 %v442, 0.70710677
        %v490 = vmul.f32 %v462, 0.70710677
        %v491 = vmul.f32 %v482, 0.70710677
        %v492 = vmul.f32 %v488, %v488
        %v493 = vmin.f32 16.0, %v492
        %v494 = vmul.f32 %v493, 2.1237322e-06
        %v495 = vadd.f32 %v494, 0.00028619796
        %v496 = vmul.f32 %v493, %v495
        %v497 = vadd.f32 %v496, 0.0036580483
        %v498 = vmul.f32 %v493, %v497
        %v499 = vadd.f32 %v498, 0.05243302
        %v500 = vmul.f32 %v493, %v499
        %v501 = vadd.f32 %v500, 0.18741608
        %v502 = vmul.f32 %v493, %v501
        %v503 = vadd.f32 %v502, 1.1283791
        %v504 = vmul.f32 %v488, %v503
        %v505 = vmul.f32 %v493, 3.8918573e-05
        %v506 = vadd.f32 %v505, 0.001143296
        %v507 = vmul.f32 %v493, %v506
        %v508 = vadd.f32 %v507, 0.014752088
        %v509 = vmul.f32 %v493, %v508
        %v510 = vadd.f32 %v509, 0.112945676
        %v511 = vmul.f32 %v493, %v510
        %v512 = vadd.f32 %v511, 0.4994258
        %v513 = vmul.f32 %v493, %v512
        %v514 = vadd.f32 %v513, 1.0
        %v515 = vrcp.pop %v514
        %v516 = vmul.f32 %v514, %v515
        %v517 = vsub.f32 1.0, %v516
        %v518 = vmul.f32 %v515, %v517
        %v519 = vadd.f32 %v515, %v518
        %vm520 = vweird.f32 %v514
        %vm521 = vweird.f32 %v515
        %vm522 = vmor %vm520, %vm521
        %v523 = vsel %vm522, %v515, %v519
        %v524 = vand.u32 2147483647, %v514
        %vm525 = vcmp.eq.f32.partialorder %v524, 8.507059e+37
        %v526 = vand.u32 %v514, 2147483648
        %v527 = vor.u32 1.1754944e-38, %v526
        %v528 = vsel %vm525, %v527, %v523
        %v529 = vmul.f32 %v504, %v528
        %v530 = vmin.f32 %v529, 1.0
        %v531 = vmax.f32 %v530, -1.0
        %v532 = vmul.f32 %v489, %v489
        %v533 = vmin.f32 16.0, %v532
        %v534 = vmul.f32 %v533, 2.1237322e-06
        %v535 = vadd.f32 %v534, 0.00028619796
        %v536 = vmul.f32 %v533, %v535
        %v537 = vadd.f32 %v536, 0.0036580483
        %v538 = vmul.f32 %v533, %v537
        %v539 = vadd.f32 %v538, 0.05243302
        %v540 = vmul.f32 %v533, %v539
        %v541 = vadd.f32 %v540, 0.18741608
        %v542 = vmul.f32 %v533, %v541
        %v543 = vadd.f32 %v542, 1.1283791
        %v544 = vmul.f32 %v489, %v543
        %v545 = vmul.f32 %v533, 3.8918573e-05
        %v546 = vadd.f32 %v545, 0.001143296
        %v547 = vmul.f32 %v533, %v546
        %v548 = vadd.f32 %v547, 0.014752088
        %v549 = vmul.f32 %v533, %v548
        %v550 = vadd.f32 %v549, 0.112945676
        %v551 = vmul.f32 %v533, %v550
        %v552 = vadd.f32 %v551, 0.4994258
        %v553 = vmul.f32 %v533, %v552
        %v554 = vadd.f32 %v553, 1.0
        %v555 = vrcp.pop %v554
        %v556 = vmul.f32 %v554, %v555
        %v557 = vsub.f32 1.0, %v556
        %v558 = vmul.f32 %v555, %v557
        %v559 = vadd.f32 %v555, %v558
        %vm560 = vweird.f32 %v554
        %vm561 = vweird.f32 %v555
        %vm562 = vmor %vm560, %vm561
        %v563 = vsel %vm562, %v555, %v559
        %v564 = vand.u32 2147483647, %v554
        %vm565 = vcmp.eq.f32.partialorder %v564, 8.507059e+37
        %v566 = vand.u32 %v554, 2147483648
        %v567 = vor.u32 1.1754944e-38, %v566
        %v568 = vsel %vm565, %v567, %v563
        %v569 = vmul.f32 %v544, %v568
        %v570 = vmin.f32 %v569, 1.0
        %v571 = vmax.f32 %v570, -1.0
        %v572 = vmul.f32 %v490, %v490
        %v573 = vmin.f32 16.0, %v572
        %v574 = vmul.f32 %v573, 2.1237322e-06
        %v575 = vadd.f32 %v574, 0.00028619796
        %v576 = vmul.f32 %v573, %v575
        %v577 = vadd.f32 %v576, 0.0036580483
        %v578 = vmul.f32 %v573, %v577
        %v579 = vadd.f32 %v578, 0.05243302
        %v580 = vmul.f32 %v573, %v579
        %v581 = vadd.f32 %v580, 0.18741608
        %v582 = vmul.f32 %v573, %v581
        %v583 = vadd.f32 %v582, 1.1283791
        %v584 = vmul.f32 %v490, %v583
        %v585 = vmul.f32 %v573, 3.8918573e-05
        %v586 = vadd.f32 %v585, 0.001143296
        %v587 = vmul.f32 %v573, %v586
        %v588 = vadd.f32 %v587, 0.014752088
        %v589 = vmul.f32 %v573, %v588
        %v590 = vadd.f32 %v589, 0.112945676
        %v591 = vmul.f32 %v573, %v590
        %v592 = vadd.f32 %v591, 0.4994258
        %v593 = vmul.f32 %v573, %v592
        %v594 = vadd.f32 %v593, 1.0
        %v595 = vrcp.pop %v594
        %v596 = vmul.f32 %v594, %v595
        %v597 = vsub.f32 1.0, %v596
        %v598 = vmul.f32 %v595, %v597
        %v599 = vadd.f32 %v595, %v598
        %vm600 = vweird.f32 %v594
        %vm601 = vweird.f32 %v595
        %vm602 = vmor %vm600, %vm601
        %v603 = vsel %vm602, %v595, %v599
        %v604 = vand.u32 2147483647, %v594
        %vm605 = vcmp.eq.f32.partialorder %v604, 8.507059e+37
        %v606 = vand.u32 %v594, 2147483648
        %v607 = vor.u32 1.1754944e-38, %v606
        %v608 = vsel %vm605, %v607, %v603
        %v609 = vmul.f32 %v584, %v608
        %v610 = vmin.f32 %v609, 1.0
        %v611 = vmax.f32 %v610, -1.0
        %v612 = vmul.f32 %v491, %v491
        %v613 = vmin.f32 16.0, %v612
        %v614 = vmul.f32 %v613, 2.1237322e-06
        %v615 = vadd.f32 %v614, 0.00028619796
        %v616 = vmul.f32 %v613, %v615
        %v617 = vadd.f32 %v616, 0.0036580483
        %v618 = vmul.f32 %v613, %v617
        %v619 = vadd.f32 %v618, 0.05243302
        %v620 = vmul.f32 %v613, %v619
        %v621 = vadd.f32 %v620, 0.18741608
        %v622 = vmul.f32 %v613, %v621
        %v623 = vadd.f32 %v622, 1.1283791
        %v624 = vmul.f32 %v491, %v623
        %v625 = vmul.f32 %v613, 3.8918573e-05
        %v626 = vadd.f32 %v625, 0.001143296
        %v627 = vmul.f32 %v613, %v626
        %v628 = vadd.f32 %v627, 0.014752088
        %v629 = vmul.f32 %v613, %v628
        %v630 = vadd.f32 %v629, 0.112945676
        %v631 = vmul.f32 %v613, %v630
        %v632 = vadd.f32 %v631, 0.4994258
        %v633 = vmul.f32 %v613, %v632
        %v634 = vadd.f32 %v633, 1.0
        %v635 = vrcp.pop %v634
        %v636 = vmul.f32 %v634, %v635
        %v637 = vsub.f32 1.0, %v636
        %v638 = vmul.f32 %v635, %v637
        %v639 = vadd.f32 %v635, %v638
        %vm640 = vweird.f32 %v634
        %vm641 = vweird.f32 %v635
        %vm642 = vmor %vm640, %vm641
        %v643 = vsel %vm642, %v635, %v639
        %v644 = vand.u32 2147483647, %v634
        %vm645 = vcmp.eq.f32.partialorder %v644, 8.507059e+37
        %v646 = vand.u32 %v634, 2147483648
        %v647 = vor.u32 1.1754944e-38, %v646
        %v648 = vsel %vm645, %v647, %v643
        %v649 = vmul.f32 %v624, %v648
        %v650 = vmin.f32 %v649, 1.0
        %v651 = vmax.f32 %v650, -1.0
        %v652 = vadd.f32 %v531, 1.0
        %v653 = vadd.f32 %v571, 1.0
        %v654 = vadd.f32 %v611, 1.0
        %v655 = vadd.f32 %v651, 1.0
        %v656 = vmul.f32 %v484, %v652
        %v657 = vmul.f32 %v485, %v653
        %v658 = vmul.f32 %v486, %v654
        %v659 = vmul.f32 %v487, %v655
        %v660 = vld [vmem:[#allocation2] sm:$0xff]
        %v661 = vld [vmem:[#allocation8] sm:$0xff]
        %v662 = vld [vmem:[#allocation8 + $0x8] sm:$0xff]
        %v663 = vld [vmem:[#allocation8 + $0x10] sm:$0xff]
        %v664 = vld [vmem:[#allocation8 + $0x18] sm:$0xff]
        %v665 = vld [vmem:[#allocation8 + $0x20] sm:$0xff]
        %v666 = vld [vmem:[#allocation8 + $0x28] sm:$0xff]
        %v667 = vld [vmem:[#allocation8 + $0x30] sm:$0xff]
        %v668 = vld [vmem:[#allocation8 + $0x38] sm:$0xff]
        %v669 = vld [vmem:[#allocation8 + $0x40] sm:$0xff]
        %v670 = vld [vmem:[#allocation8 + $0x48] sm:$0xff]
        %v671 = vld [vmem:[#allocation8 + $0x50] sm:$0xff]
        %v672 = vld [vmem:[#allocation8 + $0x58] sm:$0xff]
        %v673 = vld [vmem:[#allocation8 + $0x60] sm:$0xff]
        %v674 = vld [vmem:[#allocation8 + $0x68] sm:$0xff]
        %v675 = vld [vmem:[#allocation8 + $0x70] sm:$0xff]
        %v676 = vld [vmem:[#allocation8 + $0x78] sm:$0xff]
        %v677 = vld [vmem:[#allocation8 + $0x80] sm:$0xff]
        %v678 = vld [vmem:[#allocation8 + $0x88] sm:$0xff]
        %v679 = vld [vmem:[#allocation8 + $0x90] sm:$0xff]
        %v680 = vld [vmem:[#allocation8 + $0x98] sm:$0xff]
        %v681 = vld [vmem:[#allocation8 + $0xa0] sm:$0xff]
        %v682 = vld [vmem:[#allocation8 + $0xa8] sm:$0xff]
        %v683 = vld [vmem:[#allocation8 + $0xb0] sm:$0xff]
        %v684 = vld [vmem:[#allocation8 + $0xb8] sm:$0xff]
        %v685 = vld [vmem:[#allocation8 + $0xc0] sm:$0xff]
        %v686 = vld [vmem:[#allocation8 + $0xc8] sm:$0xff]
        %v687 = vld [vmem:[#allocation8 + $0xd0] sm:$0xff]
        %v688 = vld [vmem:[#allocation8 + $0xd8] sm:$0xff]
        %v689 = vld [vmem:[#allocation8 + $0xe0] sm:$0xff]
        %v690 = vld [vmem:[#allocation8 + $0xe8] sm:$0xff]
        %v691 = vld [vmem:[#allocation8 + $0xf0] sm:$0xff]
        %v692 = vld [vmem:[#allocation8 + $0xf8] sm:$0xff]
        %v693 = vld [vmem:[#allocation8 + $0x100] sm:$0xff]
        %v694 = vld [vmem:[#allocation8 + $0x108] sm:$0xff]
        %v695 = vld [vmem:[#allocation8 + $0x110] sm:$0xff]
        %v696 = vld [vmem:[#allocation8 + $0x118] sm:$0xff]
        %v697 = vld [vmem:[#allocation8 + $0x120] sm:$0xff]
        %v698 = vld [vmem:[#allocation8 + $0x128] sm:$0xff]
        %v699 = vld [vmem:[#allocation8 + $0x130] sm:$0xff]
        %v700 = vld [vmem:[#allocation8 + $0x138] sm:$0xff]
        %v701 = vld [vmem:[#allocation8 + $0x140] sm:$0xff]
        %v702 = vld [vmem:[#allocation8 + $0x148] sm:$0xff]
        %v703 = vld [vmem:[#allocation8 + $0x150] sm:$0xff]
        %v704 = vld [vmem:[#allocation8 + $0x158] sm:$0xff]
        %v705 = vld [vmem:[#allocation8 + $0x160] sm:$0xff]
        %v706 = vld [vmem:[#allocation8 + $0x168] sm:$0xff]
        %v707 = vld [vmem:[#allocation8 + $0x170] sm:$0xff]
        %v708 = vld [vmem:[#allocation8 + $0x178] sm:$0xff]
        %v709 = vld [vmem:[#allocation8 + $0x180] sm:$0xff]
        %v710 = vld [vmem:[#allocation8 + $0x188] sm:$0xff]
        %v711 = vld [vmem:[#allocation8 + $0x190] sm:$0xff]
        %v712 = vld [vmem:[#allocation8 + $0x198] sm:$0xff]
        %v713 = vld [vmem:[#allocation8 + $0x1a0] sm:$0xff]
        %v714 = vld [vmem:[#allocation8 + $0x1a8] sm:$0xff]
        %v715 = vld [vmem:[#allocation8 + $0x1b0] sm:$0xff]
        %v716 = vld [vmem:[#allocation8 + $0x1b8] sm:$0xff]
        %v717 = vld [vmem:[#allocation8 + $0x1c0] sm:$0xff]
        %v718 = vld [vmem:[#allocation8 + $0x1c8] sm:$0xff]
        %v719 = vld [vmem:[#allocation8 + $0x1d0] sm:$0xff]
        %v720 = vld [vmem:[#allocation8 + $0x1d8] sm:$0xff]
        %v721 = vld [vmem:[#allocation8 + $0x1e0] sm:$0xff]
        %v722 = vld [vmem:[#allocation8 + $0x1e8] sm:$0xff]
        %v723 = vld [vmem:[#allocation8 + $0x1f0] sm:$0xff]
        %v724 = vld [vmem:[#allocation8 + $0x1f8] sm:$0xff]
        %725 = vmatpush.msra.mxu0 %v676
        %726 = vmatpush.msra.mxu0 %v675
        %727 = vmatpush.msra.mxu0 %v674
        %728 = vmatpush.msra.mxu0 %v673
        %729 = vmatpush.msra.mxu0 %v672
        %730 = vmatpush.msra.mxu0 %v671
        %731 = vmatpush.msra.mxu0 %v670
        %732 = vmatpush.msra.mxu0 %v669
        %733 = vmatpush.msra.mxu0 %v668
        %734 = vmatpush.msra.mxu0 %v667
        %735 = vmatpush.msra.mxu0 %v666
        %736 = vmatpush.msra.mxu0 %v665
        %737 = vmatpush.msra.mxu0 %v664
        %738 = vmatpush.msra.mxu0 %v663
        %739 = vmatpush.msra.mxu0 %v662
        %740 = vmatpush.msra.mxu0 %v661
        %741 = vmatmul.f32.gmra.mxu0 %v656
        %v742 = vpop.f32.mrf.mxu0
        %v743 = vadd.f32 0.0, %v742
        %744 = vdwg.mxu0
        %745 = vmatpush.msra.mxu0 %v692
        %746 = vmatpush.msra.mxu0 %v691
        %747 = vmatpush.msra.mxu0 %v690
        %748 = vmatpush.msra.mxu0 %v689
        %749 = vmatpush.msra.mxu0 %v688
        %750 = vmatpush.msra.mxu0 %v687
        %751 = vmatpush.msra.mxu0 %v686
        %752 = vmatpush.msra.mxu0 %v685
        %753 = vmatpush.msra.mxu0 %v684
        %754 = vmatpush.msra.mxu0 %v683
        %755 = vmatpush.msra.mxu0 %v682
        %756 = vmatpush.msra.mxu0 %v681
        %757 = vmatpush.msra.mxu0 %v680
        %758 = vmatpush.msra.mxu0 %v679
        %759 = vmatpush.msra.mxu0 %v678
        %760 = vmatpush.msra.mxu0 %v677
        %761 = vmatmul.f32.gmra.mxu0 %v657
        %v762 = vpop.f32.mrf.mxu0
        %v763 = vadd.f32 %v743, %v762
        %764 = vdwg.mxu0
        %765 = vmatpush.msra.mxu0 %v708
        %766 = vmatpush.msra.mxu0 %v707
        %767 = vmatpush.msra.mxu0 %v706
        %768 = vmatpush.msra.mxu0 %v705
        %769 = vmatpush.msra.mxu0 %v704
        %770 = vmatpush.msra.mxu0 %v703
        %771 = vmatpush.msra.mxu0 %v702
        %772 = vmatpush.msra.mxu0 %v701
        %773 = vmatpush.msra.mxu0 %v700
        %774 = vmatpush.msra.mxu0 %v699
        %775 = vmatpush.msra.mxu0 %v698
        %776 = vmatpush.msra.mxu0 %v697
        %777 = vmatpush.msra.mxu0 %v696
        %778 = vmatpush.msra.mxu0 %v695
        %779 = vmatpush.msra.mxu0 %v694
        %780 = vmatpush.msra.mxu0 %v693
        %781 = vmatmul.f32.gmra.mxu0 %v658
        %v782 = vpop.f32.mrf.mxu0
        %v783 = vadd.f32 %v763, %v782
        %784 = vdwg.mxu0
        %785 = vmatpush.msra.mxu0 %v724
        %786 = vmatpush.msra.mxu0 %v723
        %787 = vmatpush.msra.mxu0 %v722
        %788 = vmatpush.msra.mxu0 %v721
        %789 = vmatpush.msra.mxu0 %v720
        %790 = vmatpush.msra.mxu0 %v719
        %791 = vmatpush.msra.mxu0 %v718
        %792 = vmatpush.msra.mxu0 %v717
        %793 = vmatpush.msra.mxu0 %v716
        %794 = vmatpush.msra.mxu0 %v715
        %795 = vmatpush.msra.mxu0 %v714
        %796 = vmatpush.msra.mxu0 %v713
        %797 = vmatpush.msra.mxu0 %v712
        %798 = vmatpush.msra.mxu0 %v711
        %799 = vmatpush.msra.mxu0 %v710
        %800 = vmatpush.msra.mxu0 %v709
        %801 = vmatmul.f32.gmra.mxu0 %v659
        %v802 = vpop.f32.mrf.mxu0
        %v803 = vadd.f32 %v783, %v802
        %804 = vdwg.mxu0
        %v805 = vadd.f32 %v660, %v803
        %806 = vst [vmem:[#allocation2] sm:$0xff] %v805
        // Predicated region
        $region57: #{_mlp_forward_impl.1} parent=39 // pred_check
          %p807 = pneg %p324
        $region58: #{_mlp_forward_impl.1} parent=39 // pred_check_branch
          %809 = sbr.rel (%p807) target = $region60
        $region59: #{_mlp_forward_impl.1} parent=39 // pred_region
          %v810 = vld [vmem:[#allocation2] sm:$0xff]
          %v811 = vld [vmem:[%s4] sm:$0x1]
          %v813 = vperm.slane %v811, 0
          %v815 = vadd.f32 %v810, %v813
          %816 = vst [vmem:[%s316] sm:$0xff] %v815
        $region60: #{_mlp_forward_impl.1} parent=39 // pred_fallthru
          _
        %s817 = sand.u32 %s168, 1
        %s818 = scalar_lea.sflag [#allocation5], %s817
        %s819 = sand.u32 %s168, 1
        %s820 = smul.addr %s819, 8
        %s821 = scalar_lea.vmem [#allocation9], %s820
        // Predicated region
        $region61: #{_mlp_forward_impl.1} parent=39 // pred_check
          %p822 = pneg %p178
        $region62: #{_mlp_forward_impl.1} parent=39 // pred_check_branch
          %824 = sbr.rel (%p822) target = $region64
        $region63: #{_mlp_forward_impl.1} parent=39 // pred_region
          %826 = vsyncadd %s818, 0
          %s827 = smul.addr %s27, 8
          %s828 = scalar_lea.hbm %s5, %s827
          %s830 = sshll.u32 %s821, 4
          %s831 = int_to_ptr.vmem [resolvable:$true] %s830
          %s832 = sshll.u32 %s828, 4
          %s833 = int_to_ptr.hbm [resolvable:$true] %s832
          %835 = dma.vmem_to_hbm [thread:$0]  %s831, 128, %s833, %s818
        $region64: #{_mlp_forward_impl.1} parent=39 // pred_fallthru
          _
      $region40: #{_mlp_forward_impl.1} parent=5 // pred_fallthru
        _
      %p836 = scmp.le.s32.totalorder 2, %s18
      // Predicated region
      $region65: #{_mlp_forward_impl.1} parent=5 // pred_check
        %p837 = pneg %p836
      $region66: #{_mlp_forward_impl.1} parent=5 // pred_check_branch
        %839 = sbr.rel (%p837) target = $region68
      $region67: #{_mlp_forward_impl.1} parent=5 // pred_region
        %s840 = ssub.s32 %s18, 2
        // Predicated region
        $region69: #{_mlp_forward_impl.1} parent=67 // pred_check
          %p841 = pneg %p184
        $region70: #{_mlp_forward_impl.1} parent=67 // pred_check_branch
          %843 = sbr.rel (%p841) target = $region72
        $region71: #{_mlp_forward_impl.1} parent=67 // pred_region
          %s844 = sand.u32 %s169, 1
          %s845 = scalar_lea.sflag [#allocation5], %s844
          %s846 = sand.u32 %s169, 1
          %s847 = smul.addr %s846, 8
          %s848 = scalar_lea.vmem [#allocation9], %s847
          %850 = dma.done %s845, 128
        $region72: #{_mlp_forward_impl.1} parent=67 // pred_fallthru
          _
      $region68: #{_mlp_forward_impl.1} parent=5 // pred_fallthru
        _
    $region6: #{_mlp_forward_impl.1} parent=1 // loop_footer
      %s22 = sadd.s32 1, %s18
    $region7: #{_mlp_forward_impl.1} parent=1 // loop_footer_branch
      %17 = sbr.rel target = $region3
    $region8: #{_mlp_forward_impl.1} parent=1 // loop_exit
      _
    %851 = vsyncpa [#allocation4], 1
    %s852 = scalar_lea.sflag [#allocation4], 1
    %853 = vsyncpa %s852, 1
    %854 = vsyncpa [#allocation7], 1
    %855 = vsyncpa [#allocation5], 1
    %s856 = scalar_lea.sflag [#allocation5], 1
    %857 = vsyncpa %s856, 1

</llo_original>
